<compile_context>
chip_gen: v7x
topology: tpu7x:2x2x1
jax: 0.10.0
libtpu: 0.0.40
codegen_flags: <defaults>
</compile_context>

<pallas_src>
import jax
import jax.numpy as jnp
from jax import lax
from jax.experimental import pallas as pl
from jax.experimental.pallas import tpu as pltpu


def _round_up(a, b):
    return (a + b - 1) // b * b


# ----------------------------- Pallas kernels --------------------------------

def _conv_stats_kernel(a_ref, w_ref, stats_ref):
    """Phase-decomposed ConvTranspose tile (MXU) + fused BN partial sums.

    a_ref:     (tm, 4*Cin)     bf16 patch tile
    w_ref:     (4*Cin, 4*Cout) bf16 phase weight matrix
    stats_ref: (1, 2, 4*Cout)  f32  per-tile [col_sum; col_sumsq]
    """
    acc = jnp.dot(a_ref[...], w_ref[...], preferred_element_type=jnp.float32)
    s = jnp.sum(acc, axis=0, keepdims=True)             # (1, 4*Cout)
    ss = jnp.sum(acc * acc, axis=0, keepdims=True)       # (1, 4*Cout)
    stats_ref[0] = jnp.concatenate([s, ss], axis=0)      # (2, 4*Cout)


def _conv_bn_relu_kernel(a_ref, w_ref, scale_ref, shift_ref, o_ref):
    """Recompute the cheap matmul, fuse BN affine + ReLU, store bf16 (halved writeback)."""
    acc = jnp.dot(a_ref[...], w_ref[...], preferred_element_type=jnp.float32)
    y = acc * scale_ref[...] + shift_ref[...]
    o_ref[...] = jnp.maximum(y, 0.0).astype(o_ref.dtype)


# ------------------------------ host wrapper ----------------------------------

def _build_phase_weight(weight):
    """weight: (Cin, Cout, 3, 3) PyTorch ConvTranspose2d layout (stride=2, padding=1).

    Returns (4*Cin, 4*Cout) bf16 matrix.  Row layout: (dh, dw, ci) over the 2x2 input taps
    x[i+dh, j+dw]; column layout: (ph, pw, co) over the 4 output-pixel parities.  Tap (dh, dw)
    contributes to phase (ph, pw) via original kernel element (kh, kw) = (ph-2*dh+1, pw-2*dw+1)
    when that index is in range.
    """
    Cin, Cout, kh, kw = weight.shape
    w_big = jnp.zeros((4 * Cin, 4 * Cout), jnp.float32)
    for dh in (0, 1):
        for dw in (0, 1):
            tap = dh * 2 + dw
            for ph in (0, 1):
                for pw in (0, 1):
                    k_h = ph - 2 * dh + 1
                    k_w = pw - 2 * dw + 1
                    if 0 <= k_h < kh and 0 <= k_w < kw:
                        phase = ph * 2 + pw
                        w_big = w_big.at[tap * Cin:(tap + 1) * Cin,
                                         phase * Cout:(phase + 1) * Cout].set(
                            weight[:, :, k_h, k_w])
    return w_big.astype(jnp.bfloat16)


def _choose_tiling(M, tile_m, kdim, n_cols, vmem_budget=20 << 20):
    """Pick a row-tile size tm and (possibly padded) row count.

    Prefers tm that (a) fits a per-step VMEM budget, (b) divides M exactly (no padded-row
    copy), (c) gives >= 4 grid steps so both v7x TensorCores get >= 2 pipeline steps each.
    """
    # per-step VMEM per tile row: dbl-buffered bf16 patches + dbl-buffered bf16 out + f32 acc
    per_row = 2 * kdim * 2 + 2 * n_cols * 2 + n_cols * 4
    fixed = 2 * kdim * n_cols * 2                         # dbl-buffered bf16 weights
    cap = min(tile_m, max(8, (vmem_budget - fixed) // max(per_row, 1)))
    cap = min(cap, _round_up(M, 8))
    cap = max(8, cap - cap % 8)
    divisors = [t for t in range(8, cap + 1, 8) if M % t == 0]
    if divisors:
        preferred = [t for t in divisors if M // t >= 4]
        tm = max(preferred) if preferred else max(divisors)
        return tm, M
    # fallback: zero-pad rows (they add exactly 0 to the fused BN sums; sliced off at the end)
    return cap, _round_up(M, cap)


def deconv2d_forward(x, weight, gamma, beta, *, stride=2, eps=1e-5, tile_m=512):
    """Forward pass of DeConv2d: ConvTranspose2d -> BatchNorm2d(train) -> ReLU.

    x:      (N, Cin, H, W)  f32, NCHW (PyTorch convention)
    weight: (Cin, Cout, 3, 3) PyTorch ConvTranspose2d weight, bias=False
    gamma, beta: (Cout,) BatchNorm2d affine parameters
    Returns (N, Cout, 2H, 2W) f32.
    """
    N, Cin, H, W = x.shape
    wCin, Cout, kh, kw = weight.shape
    assert wCin == Cin
    assert (kh, kw) == (3, 3) and stride == 2, (
        "phase-decomposed path implemented for kernel_size=3, stride=2, "
        "padding=1, output_padding=1, dilation=1")
    # TODO(synk): other (kernel_size, stride, dilation) DeConv2d configs are not implemented.

    Ho, Wo = 2 * H, 2 * W
    M = N * H * W                       # matmul rows: one per *input* pixel
    Kdim = 4 * Cin                      # 2x2 neighbour taps (note: lane-sparse for tiny Cin)
    n_cols = 4 * Cout                   # exact column count: no padded lanes hit HBM

    # ---- cheap glue on the small input: NCHW -> NHWC, +1 zero pad bottom/right, bf16 ----
    x_nhwc = jnp.transpose(x, (0, 2, 3, 1))
    xp = jnp.pad(x_nhwc, ((0, 0), (0, 1), (0, 1), (0, 0))).astype(jnp.bfloat16)
    # TODO(synk): the 2x2 tap gather below materializes a ~4x-input patches array in HBM; it
    # could be fused into the kernels with a manual halo DMA from xp (memory_space=pl.ANY).
    taps = [xp[:, dh:dh + H, dw:dw + W, :] for dh in (0, 1) for dw in (0, 1)]
    patches = jnp.concatenate(taps, axis=-1).reshape(M, Kdim)     # (M, 4*Cin) bf16

    w_big = _build_phase_weight(weight)                            # (4*Cin, 4*Cout) bf16

    tm, M_pad = _choose_tiling(M, tile_m, Kdim, n_cols)
    if M_pad != M:
        patches = jnp.pad(patches, ((0, M_pad - M), (0, 0)))
    grid_m = M_pad // tm

    # explicit VMEM budget (v7x: 64 MiB physical / 32 MiB default scoped)
    vmem_est = (2 * tm * Kdim * 2 + 2 * tm * n_cols * 2
                + 2 * Kdim * n_cols * 2 + tm * n_cols * 4 + (1 << 20))
    cparams = pltpu.CompilerParams(
        dimension_semantics=("parallel",),
        vmem_limit_bytes=int(min(48 << 20, max(32 << 20, 2 * vmem_est))))

    # ---- pass 1: matmul + fused per-column sum / sum-of-squares (conv never hits HBM) ----
    stats = pl.pallas_call(
        _conv_stats_kernel,
        out_shape=jax.ShapeDtypeStruct((grid_m, 2, n_cols), jnp.float32),
        grid_spec=pltpu.PrefetchScalarGridSpec(
            num_scalar_prefetch=0,
            grid=(grid_m,),
            in_specs=[pl.BlockSpec((tm, Kdim), lambda i: (i, 0)),
                      pl.BlockSpec((Kdim, n_cols), lambda i: (0, 0))],
            out_specs=pl.BlockSpec((1, 2, n_cols), lambda i: (i, 0, 0)),
        ),
        compiler_params=cparams,
    )(patches, w_big)

    # ---- finalize BN on tiny (Cout,) vectors (training-mode biased batch stats) ----
    # NOTE: variance uses E[y^2]-E[y]^2 with f32 partial sums (all math on the bf16 conv
    # output); adequate at these scales, can lose precision if |mean| >> std at huge N*Ho*Wo.
    col_sum = jnp.sum(stats[:, 0, :], axis=0).reshape(4, Cout)
    col_ssq = jnp.sum(stats[:, 1, :], axis=0).reshape(4, Cout)
    count = jnp.float32(N * Ho * Wo)
    mean = jnp.sum(col_sum, axis=0) / count
    var = jnp.sum(col_ssq, axis=0) / count - mean * mean          # biased, as torch BN training
    inv_std = lax.rsqrt(var + eps)
    scale_c = gamma.astype(jnp.float32) * inv_std                  # (Cout,)
    shift_c = beta.astype(jnp.float32) - mean * scale_c            # (Cout,)
    scale = jnp.tile(scale_c, 4).reshape(1, n_cols)                # phase-major column layout
    shift = jnp.tile(shift_c, 4).reshape(1, n_cols)

    # ---- pass 2: recompute the cheap matmul, fuse BN affine + ReLU, bf16 writeback ----
    out_flat = pl.pallas_call(
        _conv_bn_relu_kernel,
        out_shape=jax.ShapeDtypeStruct((M_pad, n_cols), jnp.bfloat16),
        grid_spec=pltpu.PrefetchScalarGridSpec(
            num_scalar_prefetch=0,
            grid=(grid_m,),
            in_specs=[pl.BlockSpec((tm, Kdim), lambda i: (i, 0)),
                      pl.BlockSpec((Kdim, n_cols), lambda i: (0, 0)),
                      pl.BlockSpec((1, n_cols), lambda i: (0, 0)),
                      pl.BlockSpec((1, n_cols), lambda i: (0, 0))],
            out_specs=pl.BlockSpec((tm, n_cols), lambda i: (i, 0)),
        ),
        compiler_params=cparams,
    )(patches, w_big, scale, shift)

    # ---- single fused epilogue pass: phase-major bf16 -> NCHW f32 (unavoidable transpose) ----
    if M_pad != M:
        out_flat = out_flat[:M]
    out = out_flat.reshape(N, H, W, 2, 2, Cout)                    # (n, i, j, ph, pw, co)
    out = out.transpose(0, 5, 1, 3, 2, 4).reshape(N, Cout, Ho, Wo)  # (n, co, 2i+ph, 2j+pw)
    return out.astype(jnp.float32)


# ------------------------------ reference & test -------------------------------

def _reference(x, weight, gamma, beta, eps=1e-5):
    """Pure-XLA f32 reference: ConvTranspose2d(3, s=2, p=1, op=1) -> BN(train) -> ReLU."""
    w_oihw = jnp.transpose(weight, (1, 0, 2, 3))[:, :, ::-1, ::-1]
    y = lax.conv_general_dilated(
        x, w_oihw, window_strides=(1, 1),
        padding=((1, 2), (1, 2)), lhs_dilation=(2, 2), rhs_dilation=(1, 1),
        dimension_numbers=("NCHW", "OIHW", "NCHW"))
    mean = jnp.mean(y, axis=(0, 2, 3), keepdims=True)
    var = jnp.var(y, axis=(0, 2, 3), keepdims=True)
    yn = (y - mean) * lax.rsqrt(var + eps)
    yn = yn * gamma.reshape(1, -1, 1, 1) + beta.reshape(1, -1, 1, 1)
    return jnp.maximum(yn, 0.0)


if __name__ == "__main__":
    key = jax.random.PRNGKey(0)
    k_x, k_w = jax.random.split(key)

    N, Cin, Cout, H, W, ksize = 2, 4, 8, 16, 16, 3
    x = jax.random.normal(k_x, (N, Cin, H, W), dtype=jnp.float32)
    # ConvTranspose2d weight (Cin, Cout, kh, kw), bias=False (as in DeConv2d)
    weight = 0.1 * jax.random.normal(k_w, (Cin, Cout, ksize, ksize), dtype=jnp.float32)
    # BatchNorm2d default affine init: gamma=1, beta=0
    gamma = jnp.ones((Cout,), jnp.float32)
    beta = jnp.zeros((Cout,), jnp.float32)

    y = deconv2d_forward(x, weight, gamma, beta, stride=2)
    jax.block_until_ready(y)

    assert y.shape == (N, Cout, 2 * H, 2 * W), y.shape
    assert bool(jnp.all(y >= 0.0))                       # ReLU post-condition

    y_ref = _reference(x, weight, gamma, beta)
    # bf16 MXU operands + bf16 writeback vs f32 reference: allow a small tolerance
    assert bool(jnp.allclose(y, y_ref, atol=1e-1, rtol=5e-2)), \
        float(jnp.max(jnp.abs(y - y_ref)))

    print("KERNEL_OK")
</pallas_src>

<mosaic_0001>
module attributes {stable_mosaic.version = 11 : i64} {
  func.func @_conv_stats_kernel(%arg0: i32, %arg1: memref<128x16xbf16, #tpu.memory_space<vmem>>, %arg2: memref<16x32xbf16, #tpu.memory_space<vmem>>, %arg3: memref<1x2x32xf32, #tpu.memory_space<vmem>>) attributes {dimension_semantics = [#tpu.dimension_semantics<parallel>], iteration_bounds = array<i64: 4>, scalar_prefetch = 0 : i64, scratch_operands = 0 : i64, tpu.core_type = #tpu.core_type<tc>, window_params = [{transform_indices = @transform_0, window_bounds = array<i64: 128, 16>}, {pipeline_mode = #tpu.pipeline_mode<synchronous>, transform_indices = @transform_1, window_bounds = array<i64: 16, 32>}, {transform_indices = @transform_2, window_bounds = array<i64: 1, 2, 32>}]} {
    %c0 = arith.constant 0 : index
    %c0_0 = arith.constant 0 : index
    %0 = vector.load %arg1[%c0, %c0_0] : memref<128x16xbf16, #tpu.memory_space<vmem>>, vector<128x16xbf16>
    %c0_1 = arith.constant 0 : index
    %c0_2 = arith.constant 0 : index
    %1 = vector.load %arg2[%c0_1, %c0_2] : memref<16x32xbf16, #tpu.memory_space<vmem>>, vector<16x32xbf16>
    %cst = arith.constant dense<0.000000e+00> : vector<128x32xf32>
    %2 = tpu.matmul %0, %1, %cst {dimension_numbers = #tpu.dot_dimension_numbers<[1], [0], [0], [1], [0, 0, 1, 1], [], []>} : vector<128x16xbf16>, vector<16x32xbf16>, vector<128x32xf32> -> vector<128x32xf32>
    %cst_3 = arith.constant dense<0.000000e+00> : vector<32xf32>
    %3 = vector.multi_reduction <add>, %2, %cst_3 [0] : vector<128x32xf32> to vector<32xf32>
    %4 = vector.shape_cast %3 : vector<32xf32> to vector<1x32xf32>
    %5 = arith.mulf %2, %2 : vector<128x32xf32>
    %cst_4 = arith.constant dense<0.000000e+00> : vector<32xf32>
    %6 = vector.multi_reduction <add>, %5, %cst_4 [0] : vector<128x32xf32> to vector<32xf32>
    %7 = vector.shape_cast %6 : vector<32xf32> to vector<1x32xf32>
    %8 = tpu.concatenate %4, %7 in 0 : vector<1x32xf32>, vector<1x32xf32> -> vector<2x32xf32>
    %c0_5 = arith.constant 0 : index
    %c0_6 = arith.constant 0 : index
    %c0_7 = arith.constant 0 : index
    %9 = vector.load %arg3[%c0_5, %c0_6, %c0_7] : memref<1x2x32xf32, #tpu.memory_space<vmem>>, vector<1x2x32xf32>
    %10 = vector.shape_cast %9 : vector<1x2x32xf32> to vector<2x32xf32>
    %11 = vector.shape_cast %8 : vector<2x32xf32> to vector<1x2x32xf32>
    tpu.vector_store %arg3[%c0_5, %c0_6, %c0_7], %11 {strides = array<i32>} : memref<1x2x32xf32, #tpu.memory_space<vmem>>, vector<1x2x32xf32>,
    return
  }
  func.func @transform_0(%arg0: i32) -> (i32, i32) {
    %c0_i32 = arith.constant 0 : i32
    %c0_i32_0 = arith.constant 0 : i32
    return %arg0, %c0_i32 : i32, i32
  }
  func.func @transform_1(%arg0: i32) -> (i32, i32) {
    %c0_i32 = arith.constant 0 : i32
    %c0_i32_0 = arith.constant 0 : i32
    %c0_i32_1 = arith.constant 0 : i32
    return %c0_i32, %c0_i32_0 : i32, i32
  }
  func.func @transform_2(%arg0: i32) -> (i32, i32, i32) {
    %c0_i32 = arith.constant 0 : i32
    %c0_i32_0 = arith.constant 0 : i32
    %c0_i32_1 = arith.constant 0 : i32
    return %arg0, %c0_i32, %c0_i32_0 : i32, i32, i32
  }
}

</mosaic_0001>

<llo_original>
// kernel: tpu_custom_call.1
$region0: #{tpu_custom_call.1}
  #allocation0 [shape = 'u32[]', space=smem, size = 0x4, offset = 0x4, fixed_abs, tag = 'smem constant byte address 0x4 - core index']
  #allocation1 [shape = 'u32[144,128]{1,0:T(1,128)}', space=vmem, size = 0x12000, scoped, tag = 'internal scratch']
  %s0 = inlined_call_operand.vmem [shape: bf16[512,16], index: 0, kind: input, shape index: {}]
  %s1 = inlined_call_operand.vmem [shape: bf16[16,32], index: 1, kind: input, shape index: {}]
  %s2 = inlined_call_operand.hbm [shape: f32[4,2,32], index: 2, kind: output, shape index: {}]
  %s3 = sld [smem:[#allocation0]]
  $region41: #{tpu_custom_call.1} parent=0
    _
  %s5 = ssub.s32 1, %s3
  %s6 = scalar_select 0, %s5, %s3
  $region1: #{tpu_custom_call.1} parent=0
    #allocation2 [shape = 'u8[2048]{0}', space=vmem, size = 0x800, scoped, tag = 'output window, operand 0']
    #allocation3 [shape = 's32[2]{0}', space=sflag, size = 0x8, scoped, tag = 'scoped memory for tpu_custom_call.1']
    %7 = vsyncpa [#allocation3], 0
    %s8 = scalar_lea.sflag [#allocation3], 1
    %9 = vsyncpa %s8, 0
    loop: start=0, step=1, limit=6
    $region2: #{tpu_custom_call.1} parent=1 // loop_pre_header
      _
    $region3: #{tpu_custom_call.1} parent=1 // loop_header
      %s11 = sphi 0, %s15
      %p12 = scmp.ge.s32.totalorder %s11, 6
      %s21 = sphi 0, %s23
      %s24 = sphi 0, %s21
      %s25 = sphi 0, %s24
      %s41 = sphi 0, %s25
      %s45 = sphi 0, %s45
      %s47 = sphi 0, %s45
      %s48 = sphi 0, %s47
      %s62 = sphi 0, %s48
      %s68 = sphi 0, %s70
      %s71 = sphi 0, %s68
      %s72 = sphi 0, %s71
      %s88 = sphi 0, %s72
    $region4: #{tpu_custom_call.1} parent=1 // loop_header_branch
      %14 = sbr.rel (%p12) target = $region8
    $region5: #{tpu_custom_call.1} parent=1 // loop_body
      %s16 = ssub.s32 %s11, 1
      %s17 = ssub.s32 %s11, 2
      %s18 = sadd.s32 %s11, 1
      %s19 = ssub.s32 %s11, %s18
      %p20 = scmp.eq.s32.totalorder %s19, 0
      %s22 = sadd.s32 %s21, 1
      %s23 = scalar_select %p20, %s21, %s22
      %p26 = pneg %p20
      %p27 = scmp.eq.s32.totalorder %s11, 3
      %p28 = por %p26, %p27
      %p29 = scmp.ne.s32.totalorder %s21, %s24
      %p30 = scmp.eq.s32.totalorder %s11, 0
      %p31 = por %p29, %p30
      %p32 = scmp.ne.s32.totalorder %s21, %s24
      %p33 = scmp.eq.s32.totalorder %s16, 3
      %p34 = por %p32, %p33
      %p35 = scmp.ne.s32.totalorder %s24, %s25
      %p36 = scmp.eq.s32.totalorder %s16, 0
      %p37 = por %p35, %p36
      %p38 = scmp.ne.s32.totalorder %s24, %s25
      %p39 = scmp.eq.s32.totalorder %s17, 3
      %p40 = por %p38, %p39
      %p42 = scmp.ne.s32.totalorder %s25, %s41
      %p43 = scmp.eq.s32.totalorder %s17, 0
      %p44 = por %p42, %p43
      %s46 = sadd.s32 %s45, 1
      %p49 = scmp.eq.s32.totalorder %s11, 3
      %p50 = scmp.ne.s32.totalorder %s45, %s47
      %p51 = scmp.eq.s32.totalorder %s11, 0
      %p52 = por %p50, %p51
      %p53 = scmp.ne.s32.totalorder %s45, %s47
      %p54 = scmp.eq.s32.totalorder %s16, 3
      %p55 = por %p53, %p54
      %p56 = scmp.ne.s32.totalorder %s47, %s48
      %p57 = scmp.eq.s32.totalorder %s16, 0
      %p58 = por %p56, %p57
      %p59 = scmp.ne.s32.totalorder %s47, %s48
      %p60 = scmp.eq.s32.totalorder %s17, 3
      %p61 = por %p59, %p60
      %p63 = scmp.ne.s32.totalorder %s48, %s62
      %p64 = scmp.eq.s32.totalorder %s17, 0
      %p65 = por %p63, %p64
      %s66 = ssub.s32 %s11, %s18
      %p67 = scmp.eq.s32.totalorder %s66, 0
      %s69 = sadd.s32 %s68, 1
      %s70 = scalar_select %p67, %s68, %s69
      %p73 = pneg %p67
      %p74 = scmp.eq.s32.totalorder %s11, 3
      %p75 = por %p73, %p74
      %p76 = scmp.ne.s32.totalorder %s68, %s71
      %p77 = scmp.eq.s32.totalorder %s11, 0
      %p78 = por %p76, %p77
      %p79 = scmp.ne.s32.totalorder %s68, %s71
      %p80 = scmp.eq.s32.totalorder %s16, 3
      %p81 = por %p79, %p80
      %p82 = scmp.ne.s32.totalorder %s71, %s72
      %p83 = scmp.eq.s32.totalorder %s16, 0
      %p84 = por %p82, %p83
      %p85 = scmp.ne.s32.totalorder %s71, %s72
      %p86 = scmp.eq.s32.totalorder %s17, 3
      %p87 = por %p85, %p86
      %p89 = scmp.ne.s32.totalorder %s72, %s88
      %p90 = scmp.eq.s32.totalorder %s17, 0
      %p91 = por %p89, %p90
      %p92 = scmp.le.s32.totalorder 1, %s11
      %p93 = scmp.lt.s32.totalorder %s11, 5
      %p94 = pnand %p92, %p93
      %p95 = pneg %p94
      // Predicated region
      $region9: #{tpu_custom_call.1} parent=5 // pred_check
        _
      $region10: #{tpu_custom_call.1} parent=5 // pred_check_branch
        %97 = sbr.rel (%p94) target = $region12
      $region11: #{tpu_custom_call.1} parent=5 // pred_region
        %s98 = ssub.s32 %s11, 1
        // Predicated region
        $region13: #{tpu_custom_call.1} parent=11 // pred_check
          %p99 = pneg %p58
        $region14: #{tpu_custom_call.1} parent=11 // pred_check_branch
          %101 = sbr.rel (%p99) target = $region16
        $region15: #{tpu_custom_call.1} parent=11 // pred_region
          _
        $region16: #{tpu_custom_call.1} parent=11 // pred_fallthru
          _
      $region12: #{tpu_custom_call.1} parent=5 // pred_fallthru
        _
      %p102 = scmp.lt.s32.totalorder %s11, 4
      // Predicated region
      $region17: #{tpu_custom_call.1} parent=5 // pred_check
        %p103 = pneg %p102
      $region18: #{tpu_custom_call.1} parent=5 // pred_check_branch
        %105 = sbr.rel (%p103) target = $region20
      $region19: #{tpu_custom_call.1} parent=5 // pred_region
        // Predicated region
        $region21: #{tpu_custom_call.1} parent=19 // pred_check
          %p106 = pneg %p31
        $region22: #{tpu_custom_call.1} parent=19 // pred_check_branch
          %108 = sbr.rel (%p106) target = $region24
        $region23: #{tpu_custom_call.1} parent=19 // pred_region
          %s109 = smul.u32 16, %s11
          %p110 = scmp.lt.s32.totalorder %s109, 63
          %s111 = scalar_select %p110, %s109, 63
          %s112 = smul.addr %s111, 4
          %s113 = scalar_lea.vmem %s0, %s112
          %s114 = smul.u32 16, %s11
        $region24: #{tpu_custom_call.1} parent=19 // pred_fallthru
          _
      $region20: #{tpu_custom_call.1} parent=5 // pred_fallthru
        _
      %p115 = scmp.le.s32.totalorder 1, %s11
      %p116 = scmp.lt.s32.totalorder %s11, 5
      %p117 = pnand %p115, %p116
      %p118 = pneg %p117
      // Predicated region
      $region25: #{tpu_custom_call.1} parent=5 // pred_check
        _
      $region26: #{tpu_custom_call.1} parent=5 // pred_check_branch
        %120 = sbr.rel (%p117) target = $region28
      $region27: #{tpu_custom_call.1} parent=5 // pred_region
        %s121 = ssub.s32 %s11, 1
        %s122 = smul.u32 16, %s16
        %p123 = scmp.lt.s32.totalorder %s122, 63
        %s124 = scalar_select %p123, %s122, 63
        %s125 = smul.addr %s124, 4
        %s126 = scalar_lea.vmem %s0, %s125
        %p127 = pneg %p37
        %p128 = pneg %p34
        %p129 = pneg %p58
        %p130 = pneg %p55
        %p131 = pneg %p84
        %p132 = pneg %p81
        %s133 = sand.u32 %s71, 1
        %s134 = scalar_lea.sflag [#allocation3], %s133
        %s135 = sand.u32 %s71, 1
        %s136 = smul.addr %s135, 2
        %s137 = scalar_lea.vmem [#allocation2], %s136
        %s138 = smul.u32 16, %s16
        %p139 = scmp.lt.s32.totalorder %s138, 63
        %s140 = scalar_select %p139, %s138, 63
        %s141 = smul.addr %s140, 4
        %s142 = scalar_lea.vmem %s0, %s141
        %s143 = smul.u32 16, %s16
        %v145 = vld [vmem:[%s142] sm:$0xf]
        %v146 = vld [vmem:[%s142 + $0x4] sm:$0xf]
        %v147 = vld [vmem:[%s142 + $0x8] sm:$0xf]
        %v148 = vld [vmem:[%s142 + $0xc] sm:$0xf]
        %v149 = vld [vmem:[%s142 + $0x10] sm:$0xf]
        %v150 = vld [vmem:[%s142 + $0x14] sm:$0xf]
        %v151 = vld [vmem:[%s142 + $0x18] sm:$0xf]
        %v152 = vld [vmem:[%s142 + $0x1c] sm:$0xf]
        %v153 = vld [vmem:[%s142 + $0x20] sm:$0xf]
        %v154 = vld [vmem:[%s142 + $0x24] sm:$0xf]
        %v155 = vld [vmem:[%s142 + $0x28] sm:$0xf]
        %v156 = vld [vmem:[%s142 + $0x2c] sm:$0xf]
        %v157 = vld [vmem:[%s142 + $0x30] sm:$0xf]
        %v158 = vld [vmem:[%s142 + $0x34] sm:$0xf]
        %v159 = vld [vmem:[%s142 + $0x38] sm:$0xf]
        %v160 = vld [vmem:[%s142 + $0x3c] sm:$0xf]
        %v161 = vld [vmem:[%s1] sm:$0xf]
        %v162 = vld [vmem:[%s1 + $0x4] sm:$0xf]
        %v179 = vunpack.c.l.b16 %v145
        %v180 = vunpack.c.l.b16 %v146
        %v181 = vunpack.c.l.b16 %v147
        %v182 = vunpack.c.l.b16 %v148
        %v183 = vunpack.c.l.b16 %v149
        %v184 = vunpack.c.l.b16 %v150
        %v185 = vunpack.c.l.b16 %v151
        %v186 = vunpack.c.l.b16 %v152
        %v187 = vunpack.c.l.b16 %v153
        %v188 = vunpack.c.l.b16 %v154
        %v189 = vunpack.c.l.b16 %v155
        %v190 = vunpack.c.l.b16 %v156
        %v191 = vunpack.c.l.b16 %v157
        %v192 = vunpack.c.l.b16 %v158
        %v193 = vunpack.c.l.b16 %v159
        %v194 = vunpack.c.l.b16 %v160
        %v195 = vpack.c.b16 %v180, %v179
        %v196 = vpack.c.b16 %v182, %v181
        %v197 = vpack.c.b16 %v184, %v183
        %v198 = vpack.c.b16 %v186, %v185
        %v199 = vpack.c.b16 %v188, %v187
        %v200 = vpack.c.b16 %v190, %v189
        %v201 = vpack.c.b16 %v192, %v191
        %v202 = vpack.c.b16 %v194, %v193
        %v205 = vunpack.c.l.b16 %v161
        %v206 = vunpack.c.l.b16 %v162
        %v207 = vpack.c.b16 %v206, %v205
        %vm209 = vcmask 130048
        %v211 = vsel %vm209, %v195, 0
        %v214 = vsel %vm209, %v196, 0
        %v217 = vsel %vm209, %v197, 0
        %v220 = vsel %vm209, %v198, 0
        %v223 = vsel %vm209, %v199, 0
        %v226 = vsel %vm209, %v200, 0
        %v229 = vsel %vm209, %v201, 0
        %v232 = vsel %vm209, %v202, 0
        %234 = vmatprep.subr.bf16.mxu0 0
        %235 = vmatpush1.bf16.msra.mxu0 %v207
        %236 = vmatprep.subr.bf16.mxu0 0
        %237 = vmatpush1.bf16.msra.mxu0 0
        %238 = vmatprep.subr.bf16.mxu0 0
        %239 = vmatpush1.bf16.msra.mxu0 0
        %240 = vmatprep.subr.bf16.mxu0 0
        %241 = vmatpush1.bf16.msra.mxu0 0
        %242 = vmatprep.subr.bf16.mxu0 0
        %243 = vmatpush1.bf16.msra.mxu0 0
        %244 = vmatprep.subr.bf16.mxu0 0
        %245 = vmatpush1.bf16.msra.mxu0 0
        %246 = vmatprep.subr.bf16.mxu0 0
        %247 = vmatpush1.bf16.msra.mxu0 0
        %248 = vmatprep.subr.bf16.mxu0 0
        %249 = vmatpush1.bf16.msra.mxu0 0
        %250 = vmatprep.subr.bf16.mxu0 0
        %251 = vmatpush1.bf16.msra.mxu0 0
        %252 = vmatprep.subr.bf16.mxu0 0
        %253 = vmatpush1.bf16.msra.mxu0 0
        %254 = vmatprep.subr.bf16.mxu0 0
        %255 = vmatpush1.bf16.msra.mxu0 0
        %256 = vmatprep.subr.bf16.mxu0 0
        %257 = vmatpush1.bf16.msra.mxu0 0
        %258 = vmatprep.subr.bf16.mxu0 0
        %259 = vmatpush1.bf16.msra.mxu0 0
        %260 = vmatprep.subr.bf16.mxu0 0
        %261 = vmatpush1.bf16.msra.mxu0 0
        %262 = vmatprep.subr.bf16.mxu0 0
        %263 = vmatpush1.bf16.msra.mxu0 0
        %264 = vmatprep.subr.bf16.mxu0 0
        %265 = vmatpush1.bf16.msra.mxu0 0
        %266 = vmatprep.mubr.bf16.mxu0 0
        %267 = vmatmul.mubr.bf16.gmra.mrb[0].mxu0 %v211
        %v268 = vpop.f32.mrb[0].mxu0
        %v269 = vadd.f32 0.0, %v268
        %v270 = vpop.f32.mrb[0].mxu0
        %v271 = vpop.f32.mrb[0].mxu0
        %v272 = vadd.f32 0.0, %v271
        %v273 = vpop.f32.mrb[0].mxu0
        %274 = vmatprep.mubr.bf16.mxu0 0
        %275 = vmatmul.mubr.bf16.gmra.mrb[0].mxu0 %v214
        %v276 = vpop.f32.mrb[0].mxu0
        %v277 = vadd.f32 0.0, %v276
        %v278 = vpop.f32.mrb[0].mxu0
        %v279 = vpop.f32.mrb[0].mxu0
        %v280 = vadd.f32 0.0, %v279
        %v281 = vpop.f32.mrb[0].mxu0
        %282 = vmatprep.mubr.bf16.mxu0 0
        %283 = vmatmul.mubr.bf16.gmra.mrb[0].mxu0 %v217
        %v284 = vpop.f32.mrb[0].mxu0
        %v285 = vadd.f32 0.0, %v284
        %v286 = vpop.f32.mrb[0].mxu0
        %v287 = vpop.f32.mrb[0].mxu0
        %v288 = vadd.f32 0.0, %v287
        %v289 = vpop.f32.mrb[0].mxu0
        %290 = vmatprep.mubr.bf16.mxu0 0
        %291 = vmatmul.mubr.bf16.gmra.mrb[0].mxu0 %v220
        %v292 = vpop.f32.mrb[0].mxu0
        %v293 = vadd.f32 0.0, %v292
        %v294 = vpop.f32.mrb[0].mxu0
        %v295 = vpop.f32.mrb[0].mxu0
        %v296 = vadd.f32 0.0, %v295
        %v297 = vpop.f32.mrb[0].mxu0
        %298 = vmatprep.mubr.bf16.mxu0 0
        %299 = vmatmul.mubr.bf16.gmra.mrb[0].mxu0 %v223
        %v300 = vpop.f32.mrb[0].mxu0
        %v301 = vadd.f32 0.0, %v300
        %v302 = vpop.f32.mrb[0].mxu0
        %v303 = vpop.f32.mrb[0].mxu0
        %v304 = vadd.f32 0.0, %v303
        %v305 = vpop.f32.mrb[0].mxu0
        %306 = vmatprep.mubr.bf16.mxu0 0
        %307 = vmatmul.mubr.bf16.gmra.mrb[0].mxu0 %v226
        %v308 = vpop.f32.mrb[0].mxu0
        %v309 = vadd.f32 0.0, %v308
        %v310 = vpop.f32.mrb[0].mxu0
        %v311 = vpop.f32.mrb[0].mxu0
        %v312 = vadd.f32 0.0, %v311
        %v313 = vpop.f32.mrb[0].mxu0
        %314 = vmatprep.mubr.bf16.mxu0 0
        %315 = vmatmul.mubr.bf16.gmra.mrb[0].mxu0 %v229
        %v316 = vpop.f32.mrb[0].mxu0
        %v317 = vadd.f32 0.0, %v316
        %v318 = vpop.f32.mrb[0].mxu0
        %v319 = vpop.f32.mrb[0].mxu0
        %v320 = vadd.f32 0.0, %v319
        %v321 = vpop.f32.mrb[0].mxu0
        %322 = vmatprep.mubr.bf16.mxu0 0
        %323 = vmatmul.mubr.bf16.gmra.mrb[0].mxu0 %v232
        %v324 = vpop.f32.mrb[0].mxu0
        %v325 = vadd.f32 0.0, %v324
        %v326 = vpop.f32.mrb[0].mxu0
        %v327 = vpop.f32.mrb[0].mxu0
        %v328 = vadd.f32 0.0, %v327
        %v329 = vpop.f32.mrb[0].mxu0
        %330 = vdwg.mxu0
        %vm331 = vcmask 261120
        %v332 = vsel %vm331, %v269, 0.0
        %v333 = vsel %vm331, %v272, 0.0
        %v334 = vadd.f32 %v332, %v333
        %v335 = vsel %vm331, %v277, 0.0
        %v336 = vadd.f32 %v334, %v335
        %v337 = vsel %vm331, %v280, 0.0
        %v338 = vadd.f32 %v336, %v337
        %v339 = vsel %vm331, %v285, 0.0
        %v340 = vadd.f32 %v338, %v339
        %v341 = vsel %vm331, %v288, 0.0
        %v342 = vadd.f32 %v340, %v341
        %v343 = vsel %vm331, %v293, 0.0
        %v344 = vadd.f32 %v342, %v343
        %v345 = vsel %vm331, %v296, 0.0
        %v346 = vadd.f32 %v344, %v345
        %v347 = vsel %vm331, %v301, 0.0
        %v348 = vadd.f32 %v346, %v347
        %v349 = vsel %vm331, %v304, 0.0
        %v350 = vadd.f32 %v348, %v349
        %v351 = vsel %vm331, %v309, 0.0
        %v352 = vadd.f32 %v350, %v351
        %v353 = vsel %vm331, %v312, 0.0
        %v354 = vadd.f32 %v352, %v353
        %v355 = vsel %vm331, %v317, 0.0
        %v356 = vadd.f32 %v354, %v355
        %v357 = vsel %vm331, %v320, 0.0
        %v358 = vadd.f32 %v356, %v357
        %v359 = vsel %vm331, %v325, 0.0
        %v360 = vadd.f32 %v358, %v359
        %v361 = vsel %vm331, %v328, 0.0
        %v362 = vadd.f32 %v360, %v361
        %v363 = vrot.slane %v362, 4
        %v364 = vadd.f32 %v362, %v363
        %v365 = vrot.slane %v364, 2
        %v366 = vadd.f32 %v364, %v365
        %v367 = vrot.slane %v366, 1
        %v368 = vadd.f32 %v366, %v367
        %v369 = vmul.f32 %v269, %v269
        %v370 = vmul.f32 %v272, %v272
        %v371 = vmul.f32 %v277, %v277
        %v372 = vmul.f32 %v280, %v280
        %v373 = vmul.f32 %v285, %v285
        %v374 = vmul.f32 %v288, %v288
        %v375 = vmul.f32 %v293, %v293
        %v376 = vmul.f32 %v296, %v296
        %v377 = vmul.f32 %v301, %v301
        %v378 = vmul.f32 %v304, %v304
        %v379 = vmul.f32 %v309, %v309
        %v380 = vmul.f32 %v312, %v312
        %v381 = vmul.f32 %v317, %v317
        %v382 = vmul.f32 %v320, %v320
        %v383 = vmul.f32 %v325, %v325
        %v384 = vmul.f32 %v328, %v328
        %v385 = vsel %vm331, %v369, 0.0
        %v386 = vsel %vm331, %v370, 0.0
        %v387 = vadd.f32 %v385, %v386
        %v388 = vsel %vm331, %v371, 0.0
        %v389 = vadd.f32 %v387, %v388
        %v390 = vsel %vm331, %v372, 0.0
        %v391 = vadd.f32 %v389, %v390
        %v392 = vsel %vm331, %v373, 0.0
        %v393 = vadd.f32 %v391, %v392
        %v394 = vsel %vm331, %v374, 0.0
        %v395 = vadd.f32 %v393, %v394
        %v396 = vsel %vm331, %v375, 0.0
        %v397 = vadd.f32 %v395, %v396
        %v398 = vsel %vm331, %v376, 0.0
        %v399 = vadd.f32 %v397, %v398
        %v400 = vsel %vm331, %v377, 0.0
        %v401 = vadd.f32 %v399, %v400
        %v402 = vsel %vm331, %v378, 0.0
        %v403 = vadd.f32 %v401, %v402
        %v404 = vsel %vm331, %v379, 0.0
        %v405 = vadd.f32 %v403, %v404
        %v406 = vsel %vm331, %v380, 0.0
        %v407 = vadd.f32 %v405, %v406
        %v408 = vsel %vm331, %v381, 0.0
        %v409 = vadd.f32 %v407, %v408
        %v410 = vsel %vm331, %v382, 0.0
        %v411 = vadd.f32 %v409, %v410
        %v412 = vsel %vm331, %v383, 0.0
        %v413 = vadd.f32 %v411, %v412
        %v414 = vsel %vm331, %v384, 0.0
        %v415 = vadd.f32 %v413, %v414
        %v416 = vrot.slane %v415, 4
        %v417 = vadd.f32 %v415, %v416
        %v418 = vrot.slane %v417, 2
        %v419 = vadd.f32 %v417, %v418
        %v420 = vrot.slane %v419, 1
        %v421 = vadd.f32 %v419, %v420
        %vm422 = vcmask 1040384
        %v423 = vsel %vm422, %v368, %v421
        %vm424 = vcmask 254976
        %425 = vst.msk [vmem:[%s137] sm:$0x3] %vm424, %v423
        %s426 = sand.u32 %s71, 1
        %s427 = scalar_lea.sflag [#allocation3], %s426
        %s428 = sand.u32 %s71, 1
        %s429 = smul.addr %s428, 2
        %s430 = scalar_lea.vmem [#allocation2], %s429
        // Predicated region
        $region29: #{tpu_custom_call.1} parent=27 // pred_check
          %p431 = pneg %p81
        $region30: #{tpu_custom_call.1} parent=27 // pred_check_branch
          %433 = sbr.rel (%p431) target = $region32
        $region31: #{tpu_custom_call.1} parent=27 // pred_region
          %s435 = ssub.s32 32, 32
          %436 = vsyncadd %s427, %s435
          %s437 = smul.addr %s16, 32
          %s438 = scalar_lea.hbm %s2, %s437
          %s440 = sshll.u32 %s430, 4
          %s441 = int_to_ptr.vmem [resolvable:$true] %s440
          %443 = dma.vmem_to_hbm [thread:$0]  %s441, 32, %s438, %s427
        $region32: #{tpu_custom_call.1} parent=27 // pred_fallthru
          _
      $region28: #{tpu_custom_call.1} parent=5 // pred_fallthru
        _
      %p444 = scmp.le.s32.totalorder 2, %s11
      // Predicated region
      $region33: #{tpu_custom_call.1} parent=5 // pred_check
        %p445 = pneg %p444
      $region34: #{tpu_custom_call.1} parent=5 // pred_check_branch
        %447 = sbr.rel (%p445) target = $region36
      $region35: #{tpu_custom_call.1} parent=5 // pred_region
        %s448 = ssub.s32 %s11, 2
        // Predicated region
        $region37: #{tpu_custom_call.1} parent=35 // pred_check
          %p449 = pneg %p87
        $region38: #{tpu_custom_call.1} parent=35 // pred_check_branch
          %451 = sbr.rel (%p449) target = $region40
        $region39: #{tpu_custom_call.1} parent=35 // pred_region
          %s452 = sand.u32 %s72, 1
          %s453 = scalar_lea.sflag [#allocation3], %s452
          %s454 = sand.u32 %s72, 1
          %s455 = smul.addr %s454, 2
          %s456 = scalar_lea.vmem [#allocation2], %s455
          %457 = dma.done %s453, 32
        $region40: #{tpu_custom_call.1} parent=35 // pred_fallthru
          _
      $region36: #{tpu_custom_call.1} parent=5 // pred_fallthru
        _
    $region6: #{tpu_custom_call.1} parent=1 // loop_footer
      %s15 = sadd.s32 1, %s11
    $region7: #{tpu_custom_call.1} parent=1 // loop_footer_branch
      %10 = sbr.rel target = $region3
    $region8: #{tpu_custom_call.1} parent=1 // loop_exit
      _
    %458 = vsyncpa [#allocation3], 1
    %s459 = scalar_lea.sflag [#allocation3], 1
    %460 = vsyncpa %s459, 1

</llo_original>
